<compile_context>
chip_gen: v7x
topology: tpu7x:2x2x1
jax: 0.10.0
libtpu: 0.0.40
codegen_flags: <defaults>
</compile_context>

<pallas_src>
import functools
from itertools import combinations

import jax
import jax.numpy as jnp
import numpy as np
from jax.experimental import pallas as pl
from jax.experimental.pallas import tpu as pltpu


# ----------------------------- Pallas kernel ------------------------------- #
def _linear_kernel(x_ref, w_ref, b_ref, o_ref, *, apply_relu: bool):
    # x_ref: (tm, K), w_ref: (K, H), b_ref: (1, H), o_ref: (tm, H)
    y = jnp.dot(x_ref[...], w_ref[...], preferred_element_type=jnp.float32)
    y = y + b_ref[...].astype(jnp.float32)
    if apply_relu:
        y = jnp.maximum(y, 0.0)
    o_ref[...] = y.astype(o_ref.dtype)


def _round_up(x: int, m: int) -> int:
    return ((x + m - 1) // m) * m


def _pick_tile_m(M: int, max_tm: int = 4096, min_split: int = 512) -> int:
    """Tile choice for the M ('parallel') grid axis.

    * Small M: one full-M block (no padding, no per-step overhead).
    * Larger M: split so the parallel axis has at least 2 blocks (both v7x
      TensorCores get work), rounded to a sublane multiple, capped at max_tm.
      A 4096x64 f32 tile is only 1 MiB per buffer, far from any VMEM limit.
    """
    if M <= min_split:
        return M
    half = _round_up(pl.cdiv(M, 2), 8)
    return min(max_tm, half)


def pallas_linear(x, w, b, *, apply_relu: bool, max_tm: int = 4096):
    """y = relu?(x @ w + b); x:[M,K], w:[K,H], b:[H] -> [M,H].

    Overhead/HBM-bound (K, H are tiny): weights/bias stay VMEM-resident across
    M tiles via constant index maps; bias is a (1, H) row; bias + ReLU fused.
    bf16 x/w are supported (accumulation stays f32)."""
    M, K = x.shape
    K2, H = w.shape
    assert K == K2
    tm = _pick_tile_m(M, max_tm)
    grid = (pl.cdiv(M, tm),)

    return pl.pallas_call(
        functools.partial(_linear_kernel, apply_relu=apply_relu),
        out_shape=jax.ShapeDtypeStruct((M, H), x.dtype),
        grid_spec=pltpu.PrefetchScalarGridSpec(
            num_scalar_prefetch=0,
            grid=grid,
            in_specs=[
                pl.BlockSpec((tm, K), lambda i: (i, 0)),
                pl.BlockSpec((K, H), lambda i: (0, 0)),
                pl.BlockSpec((1, H), lambda i: (0, 0)),
            ],
            out_specs=pl.BlockSpec((tm, H), lambda i: (i, 0)),
        ),
        compiler_params=pltpu.CompilerParams(
            dimension_semantics=("parallel",)
        ),
    )(x, w, b.reshape(1, H))


# --------------------------- module equivalent ----------------------------- #
class Args:
    num_f_maps = 16
    DA_adv_video = "rev_grad_ssl_2"
    pair_ssl = "all"


def init_linear(key, in_feat, out_feat, dtype=jnp.float32):
    # PyTorch nn.Linear default init: U(-1/sqrt(in), 1/sqrt(in))
    kw, kb = jax.random.split(key)
    bound = 1.0 / np.sqrt(in_feat)
    w = jax.random.uniform(kw, (in_feat, out_feat), dtype, -bound, bound)
    b = jax.random.uniform(kb, (out_feat,), dtype, -bound, bound)
    return w, b


class AdvDomainClsBase:
    def __init__(self, in_feat, hidden_size, type_adv, args, key):
        self.num_f_maps = args.num_f_maps
        self.DA_adv_video = args.DA_adv_video
        self.pair_ssl = args.pair_ssl
        self.type_adv = type_adv
        self._composed_cache = {}
        k1, k2 = jax.random.split(key)
        if self.type_adv == "video" and self.DA_adv_video == "rev_grad_ssl_2":
            self.w_pair, self.b_pair = init_linear(
                k2, self.num_f_maps * 2, self.num_f_maps
            )
        self.w1, self.b1 = init_linear(k1, in_feat, hidden_size)

    def _composed_video_weights(self, num_seg):
        """Fold (static pair gather + fc_pair) AND fc1 into ONE dense matmul.

        There is no nonlinearity between fc_pair and fc1, so the full video
        branch (gather -> fc_pair -> reshape -> fc1) equals
            y = x2d @ W_tot + b_tot,     x2d: [B, num_seg*F]
        with W_tot = Wpair_big @ W1 and b_tot = bpair_big @ W1 + b1, where
        Wpair_big is the block-structured matrix encoding the pair gather +
        fc_pair.  Built once per num_seg on the host (f64 then cast), cached.
        Resident weight is [num_seg*F, H] independent of n_pair."""
        if num_seg in self._composed_cache:
            return self._composed_cache[num_seg]
        F = self.num_f_maps
        if self.pair_ssl == "adjacent":
            id_pair = [(i, i + 1) for i in range(num_seg - 1)]
        else:
            id_pair = list(combinations(range(num_seg), 2))
        w_pair = np.asarray(self.w_pair, dtype=np.float64)   # (2F, F)
        b_pair = np.asarray(self.b_pair, dtype=np.float64)   # (F,)
        w1 = np.asarray(self.w1, dtype=np.float64)           # (n_pair*F, H)
        b1 = np.asarray(self.b1, dtype=np.float64)           # (H,)
        H = w1.shape[1]
        w_tot = np.zeros((num_seg * F, H), dtype=np.float64)
        b_tot = b1.copy()
        for p, (a, b) in enumerate(id_pair):
            w1_blk = w1[p * F:(p + 1) * F, :]                 # (F, H)
            w_tot[a * F:(a + 1) * F, :] += w_pair[:F] @ w1_blk
            w_tot[b * F:(b + 1) * F, :] += w_pair[F:] @ w1_blk
            b_tot += b_pair @ w1_blk
        res = (jnp.asarray(w_tot, dtype=self.w1.dtype),
               jnp.asarray(b_tot, dtype=self.b1.dtype))
        self._composed_cache[num_seg] = res
        return res

    def __call__(self, input_data, beta):
        # GradRevLayer: identity in forward (beta only affects backward).
        # TODO(synk): gradient-reversal (x * -beta in bwd) custom_vjp not emitted (fwd only).
        feat = input_data
        if self.type_adv == "video" and self.DA_adv_video == "rev_grad_ssl_2":
            F = self.num_f_maps
            num_seg = input_data.shape[-1] // F
            feat2d = feat.reshape(-1, num_seg * F)
            w_tot, b_tot = self._composed_video_weights(num_seg)
            # Whole video branch (pair gather + fc_pair + fc1 + ReLU) as ONE
            # dot + bias + ReLU Pallas kernel — no intermediate ever exists.
            return pallas_linear(feat2d, w_tot, b_tot, apply_relu=True)
        # Frame path: fc1 + ReLU fused in one kernel.
        lead = feat.shape[:-1]
        feat2d = feat.reshape(-1, feat.shape[-1])
        out = pallas_linear(feat2d, self.w1, self.b1, apply_relu=True)
        # Dropout: identity at inference.
        # TODO(synk): training-mode dropout (stateful PRNG mask) not emitted.
        return out.reshape(lead + (out.shape[-1],))


# --------------------------------- demo ------------------------------------ #
def _ref_linear(x, w, b, relu):
    y = x @ w + b
    return jnp.maximum(y, 0.0) if relu else y


if __name__ == "__main__":
    key = jax.random.PRNGKey(0)
    k_frame, k_video, kx1, kx2, kx3 = jax.random.split(key, 5)
    args = Args()
    beta = 0.5

    # ---- frame-level classifier path: fc1 + ReLU only -----------------------
    in_feat, hidden = 64, 32
    mod_frame = AdvDomainClsBase(in_feat, hidden, "frame", args, k_frame)
    x_frame = jax.random.normal(kx1, (16, in_feat), jnp.float32)
    out_frame = mod_frame(x_frame, beta)
    jax.block_until_ready(out_frame)
    ref_frame = _ref_linear(x_frame, mod_frame.w1, mod_frame.b1, True)
    np.testing.assert_allclose(np.asarray(out_frame), np.asarray(ref_frame),
                               rtol=1e-4, atol=1e-4)

    # ---- video-level path with rev_grad_ssl_2 pair branch -------------------
    num_seg = 4
    n_pair = num_seg * (num_seg - 1) // 2          # 6 pairs ('all')
    in_feat_v = n_pair * args.num_f_maps           # 96
    mod_video = AdvDomainClsBase(in_feat_v, hidden, "video", args, k_video)
    x_video = jax.random.normal(kx2, (2, num_seg * args.num_f_maps), jnp.float32)
    out_video = mod_video(x_video, beta)
    jax.block_until_ready(out_video)

    # reference for video path (original step-by-step computation)
    fv = x_video.reshape(-1, num_seg, args.num_f_maps)
    idp = np.array(list(combinations(range(num_seg), 2)), dtype=np.int32)
    fv = fv[:, jnp.asarray(idp), :].reshape(-1, args.num_f_maps * 2)
    fv = _ref_linear(fv, mod_video.w_pair, mod_video.b_pair, False)
    fv = fv.reshape(-1, n_pair * args.num_f_maps)
    ref_video = _ref_linear(fv, mod_video.w1, mod_video.b1, True)
    np.testing.assert_allclose(np.asarray(out_video), np.asarray(ref_video),
                               rtol=1e-4, atol=1e-4)

    # ---- regression: large, non-multiple-of-8 M (partial last tile, 2 blocks)
    x_big = jax.random.normal(kx3, (700, in_feat), jnp.float32)
    out_big = mod_frame(x_big, beta)
    jax.block_until_ready(out_big)
    ref_big = _ref_linear(x_big, mod_frame.w1, mod_frame.b1, True)
    np.testing.assert_allclose(np.asarray(out_big), np.asarray(ref_big),
                               rtol=1e-4, atol=1e-4)

    assert out_frame.shape == (16, hidden)
    assert out_video.shape == (2, hidden)
    assert out_big.shape == (700, hidden)
    print("KERNEL_OK")
</pallas_src>

<mosaic_0001>
module attributes {stable_mosaic.version = 11 : i64} {
  func.func @_linear_kernel(%arg0: i32, %arg1: memref<16x64xf32, #tpu.memory_space<vmem>>, %arg2: memref<64x32xf32, #tpu.memory_space<vmem>>, %arg3: memref<1x32xf32, #tpu.memory_space<vmem>>, %arg4: memref<16x32xf32, #tpu.memory_space<vmem>>) attributes {dimension_semantics = [#tpu.dimension_semantics<parallel>], iteration_bounds = array<i64: 1>, scalar_prefetch = 0 : i64, scratch_operands = 0 : i64, tpu.core_type = #tpu.core_type<tc>, window_params = [{transform_indices = @transform_0, window_bounds = array<i64: 16, 64>}, {pipeline_mode = #tpu.pipeline_mode<synchronous>, transform_indices = @transform_1, window_bounds = array<i64: 64, 32>}, {pipeline_mode = #tpu.pipeline_mode<synchronous>, transform_indices = @transform_2, window_bounds = array<i64: 1, 32>}, {transform_indices = @transform_3, window_bounds = array<i64: 16, 32>}]} {
    %c0 = arith.constant 0 : index
    %c0_0 = arith.constant 0 : index
    %0 = vector.load %arg1[%c0, %c0_0] : memref<16x64xf32, #tpu.memory_space<vmem>>, vector<16x64xf32>
    %c0_1 = arith.constant 0 : index
    %c0_2 = arith.constant 0 : index
    %1 = vector.load %arg2[%c0_1, %c0_2] : memref<64x32xf32, #tpu.memory_space<vmem>>, vector<64x32xf32>
    %cst = arith.constant dense<0.000000e+00> : vector<16x32xf32>
    %2 = tpu.matmul %0, %1, %cst {dimension_numbers = #tpu.dot_dimension_numbers<[1], [0], [0], [1], [0, 0, 1, 1], [], []>} : vector<16x64xf32>, vector<64x32xf32>, vector<16x32xf32> -> vector<16x32xf32>
    %c0_3 = arith.constant 0 : index
    %c0_4 = arith.constant 0 : index
    %3 = vector.load %arg3[%c0_3, %c0_4] : memref<1x32xf32, #tpu.memory_space<vmem>>, vector<1x32xf32>
    %4 = vector.broadcast %3 : vector<1x32xf32> to vector<16x32xf32>
    %5 = arith.addf %2, %4 : vector<16x32xf32>
    %cst_5 = arith.constant 0.000000e+00 : f32
    %6 = vector.broadcast %cst_5 : f32 to vector<16x32xf32>
    %7 = arith.maximumf %5, %6 : vector<16x32xf32>
    %c0_6 = arith.constant 0 : index
    %c0_7 = arith.constant 0 : index
    %8 = vector.load %arg4[%c0_6, %c0_7] : memref<16x32xf32, #tpu.memory_space<vmem>>, vector<16x32xf32>
    tpu.vector_store %arg4[%c0_6, %c0_7], %7 {strides = array<i32>} : memref<16x32xf32, #tpu.memory_space<vmem>>, vector<16x32xf32>,
    return
  }
  func.func @transform_0(%arg0: i32) -> (i32, i32) {
    %c0_i32 = arith.constant 0 : i32
    %c0_i32_0 = arith.constant 0 : i32
    return %arg0, %c0_i32 : i32, i32
  }
  func.func @transform_1(%arg0: i32) -> (i32, i32) {
    %c0_i32 = arith.constant 0 : i32
    %c0_i32_0 = arith.constant 0 : i32
    %c0_i32_1 = arith.constant 0 : i32
    return %c0_i32, %c0_i32_0 : i32, i32
  }
  func.func @transform_2(%arg0: i32) -> (i32, i32) {
    %c0_i32 = arith.constant 0 : i32
    %c0_i32_0 = arith.constant 0 : i32
    %c0_i32_1 = arith.constant 0 : i32
    return %c0_i32, %c0_i32_0 : i32, i32
  }
  func.func @transform_3(%arg0: i32) -> (i32, i32) {
    %c0_i32 = arith.constant 0 : i32
    %c0_i32_0 = arith.constant 0 : i32
    return %arg0, %c0_i32 : i32, i32
  }
}

</mosaic_0001>

<llo_original>
// kernel: tpu_custom_call.1
$region0: #{tpu_custom_call.1}
  #allocation0 [shape = 'u32[]', space=smem, size = 0x4, offset = 0x4, fixed_abs, tag = 'smem constant byte address 0x4 - core index']
  #allocation1 [shape = 'u32[144,128]{1,0:T(1,128)}', space=vmem, size = 0x12000, scoped, tag = 'internal scratch']
  %s0 = inlined_call_operand.vmem [shape: f32[16,64], index: 0, kind: input, shape index: {}]
  %s1 = inlined_call_operand.vmem [shape: f32[64,32], index: 1, kind: input, shape index: {}]
  %s2 = inlined_call_operand.vmem [shape: f32[1,32], index: 2, kind: input, shape index: {}]
  %s3 = inlined_call_operand.hbm [shape: f32[16,32], index: 3, kind: output, shape index: {}]
  %s4 = sld [smem:[#allocation0]]
  $region22: #{tpu_custom_call.1} parent=0
    _
  %s6 = ssub.s32 1, %s4
  %s7 = scalar_select 0, %s6, %s4
  $region1: #{tpu_custom_call.1} parent=0
    #allocation2 [shape = 'u8[8192]{0}', space=vmem, size = 0x2000, scoped, tag = 'output window, operand 0, single buffered']
    #allocation3 [shape = 's32[1]{0}', space=sflag, size = 0x4, scoped, tag = 'scoped memory for tpu_custom_call.1']
    %8 = vsyncpa [#allocation3], 0
    // Predicated region
    $region2: #{tpu_custom_call.1} parent=1 // pred_check
      _
    $region3: #{tpu_custom_call.1} parent=1 // pred_check_branch
      %10 = sbr.rel (0) target = $region5
    $region4: #{tpu_custom_call.1} parent=1 // pred_region
      _
    $region5: #{tpu_custom_call.1} parent=1 // pred_fallthru
      _
    // Predicated region
    $region6: #{tpu_custom_call.1} parent=1 // pred_check
      _
    $region7: #{tpu_custom_call.1} parent=1 // pred_check_branch
      %12 = sbr.rel (0) target = $region9
    $region8: #{tpu_custom_call.1} parent=1 // pred_region
      _
    $region9: #{tpu_custom_call.1} parent=1 // pred_fallthru
      _
    // Predicated region
    $region10: #{tpu_custom_call.1} parent=1 // pred_check
      _
    $region11: #{tpu_custom_call.1} parent=1 // pred_check_branch
      %14 = sbr.rel (0) target = $region13
    $region12: #{tpu_custom_call.1} parent=1 // pred_region
      _
    $region13: #{tpu_custom_call.1} parent=1 // pred_fallthru
      _
    %v15 = vld [vmem:[%s0] sm:$0xff]
    %v16 = vld [vmem:[%s0 + $0x8] sm:$0xff]
    %v17 = vld [vmem:[%s1] sm:$0xff]
    %v18 = vld [vmem:[%s1 + $0x8] sm:$0xff]
    %v19 = vld [vmem:[%s1 + $0x10] sm:$0xff]
    %v20 = vld [vmem:[%s1 + $0x18] sm:$0xff]
    %v21 = vld [vmem:[%s1 + $0x20] sm:$0xff]
    %v22 = vld [vmem:[%s1 + $0x28] sm:$0xff]
    %v23 = vld [vmem:[%s1 + $0x30] sm:$0xff]
    %v24 = vld [vmem:[%s1 + $0x38] sm:$0xff]
    %v25 = vld [vmem:[%s2] sm:$0x1]
    %v27 = vlaneseq
    %v28 = vshrl.u32 %v27, 7
    %v29 = vsub.s32 0, %v28
    %v30 = vrot.slane %v25, %v29
    %vm32 = vcmask 523264
    %v34 = vsel %vm32, %v15, 0
    %v37 = vsel %vm32, %v16, 0
    %39 = vmatprep.subr.mxu0 0.0
    %40 = vmatpush1.msra.mxu0 %v17
    %41 = vmatprep.subr.mxu0 0.0
    %42 = vmatpush1.msra.mxu0 %v18
    %43 = vmatprep.subr.mxu0 0.0
    %44 = vmatpush1.msra.mxu0 %v19
    %45 = vmatprep.subr.mxu0 0.0
    %46 = vmatpush1.msra.mxu0 %v20
    %47 = vmatprep.subr.mxu0 0.0
    %48 = vmatpush1.msra.mxu0 %v21
    %49 = vmatprep.subr.mxu0 0.0
    %50 = vmatpush1.msra.mxu0 %v22
    %51 = vmatprep.subr.mxu0 0.0
    %52 = vmatpush1.msra.mxu0 %v23
    %53 = vmatprep.subr.mxu0 0.0
    %54 = vmatpush1.msra.mxu0 %v24
    %55 = vmatprep.subr.mxu0 0.0
    %56 = vmatpush1.msra.mxu0 0.0
    %57 = vmatprep.subr.mxu0 0.0
    %58 = vmatpush1.msra.mxu0 0.0
    %59 = vmatprep.subr.mxu0 0.0
    %60 = vmatpush1.msra.mxu0 0.0
    %61 = vmatprep.subr.mxu0 0.0
    %62 = vmatpush1.msra.mxu0 0.0
    %63 = vmatprep.subr.mxu0 0.0
    %64 = vmatpush1.msra.mxu0 0.0
    %65 = vmatprep.subr.mxu0 0.0
    %66 = vmatpush1.msra.mxu0 0.0
    %67 = vmatprep.subr.mxu0 0.0
    %68 = vmatpush1.msra.mxu0 0.0
    %69 = vmatprep.subr.mxu0 0.0
    %70 = vmatpush1.msra.mxu0 0.0
    %71 = vmatprep.subr.mxu0 0.0
    %72 = vmatpush1.msra.mxu0 0.0
    %73 = vmatprep.subr.mxu0 0.0
    %74 = vmatpush1.msra.mxu0 0.0
    %75 = vmatprep.subr.mxu0 0.0
    %76 = vmatpush1.msra.mxu0 0.0
    %77 = vmatprep.subr.mxu0 0.0
    %78 = vmatpush1.msra.mxu0 0.0
    %79 = vmatprep.subr.mxu0 0.0
    %80 = vmatpush1.msra.mxu0 0.0
    %81 = vmatprep.subr.mxu0 0.0
    %82 = vmatpush1.msra.mxu0 0.0
    %83 = vmatprep.subr.mxu0 0.0
    %84 = vmatpush1.msra.mxu0 0.0
    %85 = vmatprep.subr.mxu0 0.0
    %86 = vmatpush1.msra.mxu0 0.0
    %87 = vmatprep.subr.mxu0 0.0
    %88 = vmatpush1.msra.mxu0 0.0
    %89 = vmatprep.subr.mxu0 0.0
    %90 = vmatpush1.msra.mxu0 0.0
    %91 = vmatprep.subr.mxu0 0.0
    %92 = vmatpush1.msra.mxu0 0.0
    %93 = vmatprep.subr.mxu0 0.0
    %94 = vmatpush1.msra.mxu0 0.0
    %95 = vmatprep.subr.mxu0 0.0
    %96 = vmatpush1.msra.mxu0 0.0
    %97 = vmatprep.subr.mxu0 0.0
    %98 = vmatpush1.msra.mxu0 0.0
    %99 = vmatprep.subr.mxu0 0.0
    %100 = vmatpush1.msra.mxu0 0.0
    %101 = vmatprep.subr.mxu0 0.0
    %102 = vmatpush1.msra.mxu0 0.0
    %103 = vmatprep.mubr.f32.mxu0 0.0
    %104 = vmatmul.mubr.f32.gmra.mrb[0].mxu0 %v34
    %v105 = vpop.f32.mrb[0].mxu0
    %v106 = vadd.f32 %v30, %v105
    %v107 = vpop.f32.mrb[0].mxu0
    %108 = vmatprep.mubr.f32.mxu0 0.0
    %109 = vmatmul.mubr.f32.gmra.mrb[0].mxu0 %v37
    %v110 = vpop.f32.mrb[0].mxu0
    %v111 = vadd.f32 %v30, %v110
    %v112 = vpop.f32.mrb[0].mxu0
    %113 = vdwg.mxu0
    %v114 = vmax.f32 %v106, 0.0
    %v115 = vmax.f32 %v111, 0.0
    %vm116 = vcmask 261120
    %117 = vst.msk [vmem:[#allocation2] sm:$0xff] %vm116, %v114
    %118 = vst.msk [vmem:[#allocation2 + $0x8] sm:$0xff] %vm116, %v115
    // Predicated region
    $region14: #{tpu_custom_call.1} parent=1 // pred_check
      _
    $region15: #{tpu_custom_call.1} parent=1 // pred_check_branch
      %120 = sbr.rel (0) target = $region17
    $region16: #{tpu_custom_call.1} parent=1 // pred_region
      %s122 = ssub.s32 256, 256
      %123 = vsyncadd [#allocation3], %s122
      %s124 = sshll.u32 [#allocation2], 4
      %s125 = int_to_ptr.vmem [resolvable:$true] %s124
      %130 = dma.vmem_to_hbm [thread:$0]  %s125, 256, %s3, [#allocation3], 128, 128, 8
    $region17: #{tpu_custom_call.1} parent=1 // pred_fallthru
      _
    // Predicated region
    $region18: #{tpu_custom_call.1} parent=1 // pred_check
      _
    $region19: #{tpu_custom_call.1} parent=1 // pred_check_branch
      %132 = sbr.rel (0) target = $region21
    $region20: #{tpu_custom_call.1} parent=1 // pred_region
      %133 = dma.done [#allocation3], 256
    $region21: #{tpu_custom_call.1} parent=1 // pred_fallthru
      _
    %134 = vsyncpa [#allocation3], 1

</llo_original>
